<compile_context>
chip_gen: v6e
topology: v6e:2x2x1
jax: 0.10.0
libtpu: 0.0.40
codegen_flags: <defaults>
</compile_context>

<pallas_src>
import functools

import jax
import jax.numpy as jnp
import numpy as np
from jax.experimental import pallas as pl
from jax.experimental.pallas import tpu as pltpu


# ----------------------------------------------------------------------------
# Parameter setup (mirrors PositionalEncoding.__init__)
# ----------------------------------------------------------------------------
def make_pe_table(d_model: int, max_len: int = 5000) -> jnp.ndarray:
    """Builds the (max_len, d_model) sinusoidal positional-encoding buffer."""
    position = jnp.arange(0, max_len, dtype=jnp.float32)[:, None]           # (L, 1)
    div_term = jnp.exp(
        jnp.arange(0, d_model, 2, dtype=jnp.float32) * (-np.log(10000.0) / d_model)
    )                                                                        # (ceil(D/2),)
    args = position * div_term                                               # (L, ceil(D/2))
    pe = jnp.zeros((max_len, d_model), dtype=jnp.float32)
    pe = pe.at[:, 0::2].set(jnp.sin(args))
    pe = pe.at[:, 1::2].set(jnp.cos(args[:, : d_model // 2]))                # guard odd d_model
    return pe                                                                # (L, D)


# ----------------------------------------------------------------------------
# Pallas kernels
# ----------------------------------------------------------------------------
def _add_pe_kernel(x_ref, pe_ref, o_ref, *, batch_first):
    # batch_first:  x_ref (B, ts, D), pe_ref (ts, D) -> broadcast over leading B
    # seq-first:    x_ref (ts, B, D), pe_ref (ts, D) -> broadcast over middle B
    pe = pe_ref[...]
    pe = pe[None, :, :] if batch_first else pe[:, None, :]
    o_ref[...] = (x_ref[...] + pe).astype(o_ref.dtype)


def _add_pe_dropout_kernel(x_ref, pe_ref, bits_ref, o_ref, *, batch_first,
                           threshold, scale):
    # Same add, followed by inverted dropout. keep iff uint32 bits >= threshold
    # (P(keep) = 1 - p); compute stays in the input dtype.
    # TODO(synk): torch.nn.Dropout's RNG stream is not bit-reproducible here;
    #             the mask comes from jax.random bits generated in the wrapper.
    pe = pe_ref[...]
    pe = pe[None, :, :] if batch_first else pe[:, None, :]
    y = x_ref[...] + pe
    keep = bits_ref[...] >= jnp.uint32(threshold)
    o_ref[...] = jnp.where(keep, y * scale, jnp.zeros_like(y)).astype(o_ref.dtype)


# ----------------------------------------------------------------------------
# Tiling helper
# ----------------------------------------------------------------------------
def _choose_seq_tile(seq_len: int, bytes_per_seq_row: int,
                     budget_bytes: int = 4 << 20) -> int:
    """Largest multiple-of-8 seq tile whose per-stage footprint is ~budget.

    Double-buffering doubles this (~8 MiB total), which stays inside the
    default scoped-VMEM limit on v5e (16 MiB) and v6e/v7x (32 MiB) with
    headroom, including v7x's smaller 64 MiB physical VMEM.
    """
    ts = max(1, budget_bytes // max(1, bytes_per_seq_row))
    if ts >= seq_len:
        return seq_len
    return max(8, (ts // 8) * 8)


# ----------------------------------------------------------------------------
# Wrapper (forward pass)
# ----------------------------------------------------------------------------
def positional_encoding_forward(
    x: jnp.ndarray,
    pe: jnp.ndarray,
    *,
    batch_first: bool = False,
    dropout_p: float = 0.1,
    training: bool = False,
    rng_key=None,
) -> jnp.ndarray:
    """Equivalent of PositionalEncoding.forward.

    x : (S, B, D) if batch_first=False, else (B, S, D)   -- kept in native layout
    pe: (max_len, D)
    """
    if batch_first:
        B, S, D = x.shape
    else:
        S, B, D = x.shape

    pe_slice = pe[:S].astype(x.dtype)                       # (S, D), cast once

    apply_dropout = bool(training) and dropout_p > 0.0
    if apply_dropout and dropout_p >= 1.0:
        return jnp.zeros_like(x)                            # degenerate p == 1 guard

    itemsize = jnp.dtype(x.dtype).itemsize
    bytes_per_row = (B * D * (2 * itemsize + (4 if apply_dropout else 0))
                     + D * itemsize)                        # x + out (+ bits) + pe per S row
    ts = _choose_seq_tile(S, bytes_per_row)
    grid = (pl.cdiv(S, ts),)

    if batch_first:
        x_spec = pl.BlockSpec((B, ts, D), lambda i: (0, i, 0))
    else:
        x_spec = pl.BlockSpec((ts, B, D), lambda i: (i, 0, 0))
    pe_spec = pl.BlockSpec((ts, D), lambda i: (i, 0))        # indexed by S tile only
    out_shape = jax.ShapeDtypeStruct(x.shape, x.dtype)
    cparams = pltpu.CompilerParams(dimension_semantics=("parallel",))

    if not apply_dropout:
        return pl.pallas_call(
            functools.partial(_add_pe_kernel, batch_first=batch_first),
            grid=grid,
            in_specs=[x_spec, pe_spec],
            out_specs=x_spec,
            out_shape=out_shape,
            compiler_params=cparams,
        )(x, pe_slice)

    if rng_key is None:
        rng_key = jax.random.PRNGKey(0)
    # Host/XLA-side random bits: portable (no TPU-only PRNG primitive needed).
    bits = jax.random.bits(rng_key, shape=x.shape, dtype=jnp.uint32)
    threshold = min((1 << 32) - 1, int(round(dropout_p * float(1 << 32))))
    scale = 1.0 / (1.0 - dropout_p)

    return pl.pallas_call(
        functools.partial(_add_pe_dropout_kernel, batch_first=batch_first,
                          threshold=threshold, scale=scale),
        grid=grid,
        in_specs=[x_spec, pe_spec, x_spec],                  # bits shares x's layout
        out_specs=x_spec,
        out_shape=out_shape,
        compiler_params=cparams,
    )(x, pe_slice, bits)


# ----------------------------------------------------------------------------
# Main
# ----------------------------------------------------------------------------
if __name__ == "__main__":
    d_model = 32
    max_len = 64
    seq = 8
    batch = 2

    pe = make_pe_table(d_model, max_len)

    key = jax.random.PRNGKey(0)
    k1, k2, k3 = jax.random.split(key, 3)

    # ---- batch_first=False (default): x is (S, B, D) ----
    x_sf = jax.random.normal(k1, (seq, batch, d_model), dtype=jnp.float32)
    y_sf = jax.block_until_ready(
        positional_encoding_forward(x_sf, pe, batch_first=False, training=False)
    )
    ref_sf = x_sf + pe[:seq][:, None, :]
    np.testing.assert_allclose(np.asarray(y_sf), np.asarray(ref_sf),
                               rtol=1e-6, atol=1e-6)

    # ---- batch_first=True: x is (B, S, D), no wrapper transpose ----
    x_bf = jax.random.normal(k2, (batch, seq, d_model), dtype=jnp.float32)
    y_bf = jax.block_until_ready(
        positional_encoding_forward(x_bf, pe, batch_first=True, training=False)
    )
    ref_bf = x_bf + pe[:seq][None, :, :]
    np.testing.assert_allclose(np.asarray(y_bf), np.asarray(ref_bf),
                               rtol=1e-6, atol=1e-6)

    # ---- training path (inverted dropout, threshold-compare mask) ----
    y_tr = jax.block_until_ready(
        positional_encoding_forward(x_sf, pe, batch_first=False, training=True,
                                    dropout_p=0.1, rng_key=k3)
    )
    assert y_tr.shape == x_sf.shape
    assert bool(jnp.all(jnp.isfinite(y_tr)))
    # surviving elements equal (x + pe) / (1 - p)
    kept = np.asarray(y_tr) != 0.0
    np.testing.assert_allclose(
        np.asarray(y_tr)[kept], (np.asarray(ref_sf) / 0.9)[kept],
        rtol=1e-5, atol=1e-5,
    )

    print("KERNEL_OK")
</pallas_src>

<mosaic_0001>
module attributes {stable_mosaic.version = 11 : i64} {
  func.func @_add_pe_kernel(%arg0: i32, %arg1: memref<8x2x32xf32, #tpu.memory_space<vmem>>, %arg2: memref<8x32xf32, #tpu.memory_space<vmem>>, %arg3: memref<8x2x32xf32, #tpu.memory_space<vmem>>) attributes {dimension_semantics = [#tpu.dimension_semantics<parallel>], iteration_bounds = array<i64: 1>, scalar_prefetch = 0 : i64, scratch_operands = 0 : i64, tpu.core_type = #tpu.core_type<tc>, window_params = [{transform_indices = @transform_0, window_bounds = array<i64: 8, 2, 32>}, {transform_indices = @transform_1, window_bounds = array<i64: 8, 32>}, {transform_indices = @transform_2, window_bounds = array<i64: 8, 2, 32>}]} {
    %c0 = arith.constant 0 : index
    %c0_0 = arith.constant 0 : index
    %0 = vector.load %arg2[%c0, %c0_0] : memref<8x32xf32, #tpu.memory_space<vmem>>, vector<8x32xf32>
    %1 = vector.shape_cast %0 : vector<8x32xf32> to vector<8x1x32xf32>
    %c0_1 = arith.constant 0 : index
    %c0_2 = arith.constant 0 : index
    %c0_3 = arith.constant 0 : index
    %2 = vector.load %arg1[%c0_1, %c0_2, %c0_3] : memref<8x2x32xf32, #tpu.memory_space<vmem>>, vector<8x2x32xf32>
    %3 = vector.broadcast %1 : vector<8x1x32xf32> to vector<8x2x32xf32>
    %4 = arith.addf %2, %3 : vector<8x2x32xf32>
    %c0_4 = arith.constant 0 : index
    %c0_5 = arith.constant 0 : index
    %c0_6 = arith.constant 0 : index
    %5 = vector.load %arg3[%c0_4, %c0_5, %c0_6] : memref<8x2x32xf32, #tpu.memory_space<vmem>>, vector<8x2x32xf32>
    tpu.vector_store %arg3[%c0_4, %c0_5, %c0_6], %4 {strides = array<i32>} : memref<8x2x32xf32, #tpu.memory_space<vmem>>, vector<8x2x32xf32>,
    return
  }
  func.func @transform_0(%arg0: i32) -> (i32, i32, i32) {
    %c0_i32 = arith.constant 0 : i32
    %c0_i32_0 = arith.constant 0 : i32
    %c0_i32_1 = arith.constant 0 : i32
    return %arg0, %c0_i32, %c0_i32_0 : i32, i32, i32
  }
  func.func @transform_1(%arg0: i32) -> (i32, i32) {
    %c0_i32 = arith.constant 0 : i32
    %c0_i32_0 = arith.constant 0 : i32
    return %arg0, %c0_i32 : i32, i32
  }
  func.func @transform_2(%arg0: i32) -> (i32, i32, i32) {
    %c0_i32 = arith.constant 0 : i32
    %c0_i32_0 = arith.constant 0 : i32
    %c0_i32_1 = arith.constant 0 : i32
    return %arg0, %c0_i32, %c0_i32_0 : i32, i32, i32
  }
}

</mosaic_0001>

<llo_original>
// kernel: tpu_custom_call.1
$region0: #{tpu_custom_call.1}
  #allocation0 [shape = 'u32[]', space=smem, size = 0x4, offset = 0x4, fixed_abs, tag = 'smem constant byte address 0x4 - core index']
  #allocation1 [shape = 'u32[144,128]{1,0:T(1,128)}', space=vmem, size = 0x12000, scoped, tag = 'internal scratch']
  %s0 = inlined_call_operand.hbm [shape: f32[8,2,32], index: 0, kind: input, shape index: {}]
  %s1 = inlined_call_operand.hbm [shape: f32[8,32], index: 1, kind: input, shape index: {}]
  %s2 = inlined_call_operand.hbm [shape: f32[8,2,32], index: 2, kind: output, shape index: {}]
  %s3 = sld [smem:[#allocation0]]
  $region26: #{tpu_custom_call.1} parent=0
    _
  %s5 = ssub.s32 1, %s3
  %s6 = scalar_select 0, %s5, %s3
  $region1: #{tpu_custom_call.1} parent=0
    #allocation2 [shape = 'u8[8192]{0}', space=vmem, size = 0x2000, scoped, tag = 'input window, operand 0, single buffered']
    #allocation3 [shape = 's32[1]{0}', space=sflag, size = 0x4, scoped, tag = 'scoped memory for tpu_custom_call.1']
    #allocation4 [shape = 's32[1]{0}', space=sflag, size = 0x4, scoped, tag = 'scoped memory for tpu_custom_call.1']
    #allocation5 [shape = 'u8[4096]{0}', space=vmem, size = 0x1000, scoped, tag = 'input window, operand 1, single buffered']
    #allocation6 [shape = 's32[1]{0}', space=sflag, size = 0x4, scoped, tag = 'scoped memory for tpu_custom_call.1']
    #allocation7 [shape = 'u8[8192]{0}', space=vmem, size = 0x2000, scoped, tag = 'output window, operand 0, single buffered']
    %7 = vsyncpa [#allocation3], 0
    %8 = vsyncpa [#allocation6], 0
    %9 = vsyncpa [#allocation4], 0
    // Predicated region
    $region2: #{tpu_custom_call.1} parent=1 // pred_check
      _
    $region3: #{tpu_custom_call.1} parent=1 // pred_check_branch
      %11 = sbr.rel (0) target = $region5
    $region4: #{tpu_custom_call.1} parent=1 // pred_region
      %s13 = ssub.s32 256, 256
      %14 = vsyncadd [#allocation3], %s13
      %s15 = sshll.u32 [#allocation2], 4
      %s16 = int_to_ptr.vmem [resolvable:$true] %s15
      %21 = dma.hbm_to_vmem [thread:$0]  %s0, 256, %s16, [#allocation3], 32, 32, 2
    $region5: #{tpu_custom_call.1} parent=1 // pred_fallthru
      _
    // Predicated region
    $region6: #{tpu_custom_call.1} parent=1 // pred_check
      _
    $region7: #{tpu_custom_call.1} parent=1 // pred_check_branch
      %23 = sbr.rel (0) target = $region9
    $region8: #{tpu_custom_call.1} parent=1 // pred_region
      %s25 = ssub.s32 128, 128
      %26 = vsyncadd [#allocation6], %s25
      %s28 = sshll.u32 [#allocation5], 4
      %s29 = int_to_ptr.vmem [resolvable:$true] %s28
      %31 = dma.hbm_to_vmem [thread:$0]  %s1, 128, %s29, [#allocation6]
    $region9: #{tpu_custom_call.1} parent=1 // pred_fallthru
      _
    // Predicated region
    $region10: #{tpu_custom_call.1} parent=1 // pred_check
      _
    $region11: #{tpu_custom_call.1} parent=1 // pred_check_branch
      %33 = sbr.rel (0) target = $region13
    $region12: #{tpu_custom_call.1} parent=1 // pred_region
      %34 = dma.done [#allocation3], 256
    $region13: #{tpu_custom_call.1} parent=1 // pred_fallthru
      _
    // Predicated region
    $region14: #{tpu_custom_call.1} parent=1 // pred_check
      _
    $region15: #{tpu_custom_call.1} parent=1 // pred_check_branch
      %36 = sbr.rel (0) target = $region17
    $region16: #{tpu_custom_call.1} parent=1 // pred_region
      %37 = dma.done [#allocation6], 128
    $region17: #{tpu_custom_call.1} parent=1 // pred_fallthru
      _
    %v38 = vld [vmem:[#allocation5] sm:$0xff]
    %v40 = vcombine.high %v38, %v38
    %v42 = vunpack.c.l.s4 1966171168
    %v43 = vunpack.c.0.s8 %v42
    %v44 = vlaneseq
    %v45 = vshrl.u32 %v44, 7
    %v46 = vsub.s32 %v43, %v45
    %v47 = vrot.slane %v38, %v46
    %v49 = vunpack.c.l.s4 1966171168
    %v50 = vunpack.c.0.s8 %v49
    %v51 = vlaneseq
    %v52 = vshrl.u32 %v51, 7
    %v53 = vsub.s32 %v50, %v52
    %v54 = vrot.slane %v40, %v53
    %v55 = vcombine.high %v47, %v47
    %v56 = vcombine.high %v54, %v54
    %v58 = vunpack.c.l.s4 1966171168
    %v59 = vunpack.c.0.s8 %v58
    %v60 = vlaneseq
    %v61 = vshrl.u32 %v60, 7
    %v62 = vsub.s32 %v59, %v61
    %v63 = vrot.slane %v47, %v62
    %v65 = vunpack.c.l.s4 1966171168
    %v66 = vunpack.c.0.s8 %v65
    %v67 = vlaneseq
    %v68 = vshrl.u32 %v67, 7
    %v69 = vsub.s32 %v66, %v68
    %v70 = vrot.slane %v54, %v69
    %v72 = vunpack.c.l.s4 1966171168
    %v73 = vunpack.c.0.s8 %v72
    %v74 = vlaneseq
    %v75 = vshrl.u32 %v74, 7
    %v76 = vsub.s32 %v73, %v75
    %v77 = vrot.slane %v55, %v76
    %v79 = vunpack.c.l.s4 1966171168
    %v80 = vunpack.c.0.s8 %v79
    %v81 = vlaneseq
    %v82 = vshrl.u32 %v81, 7
    %v83 = vsub.s32 %v80, %v82
    %v84 = vrot.slane %v56, %v83
    %v85 = vcombine.high %v63, %v63
    %v86 = vcombine.high %v70, %v70
    %v87 = vcombine.high %v77, %v77
    %v88 = vcombine.high %v84, %v84
    %v89 = vld [vmem:[#allocation2] sm:$0x3]
    %v90 = vld [vmem:[#allocation2 + $0x2] sm:$0x3]
    %v91 = vld [vmem:[#allocation2 + $0x4] sm:$0x3]
    %v92 = vld [vmem:[#allocation2 + $0x6] sm:$0x3]
    %v93 = vld [vmem:[#allocation2 + $0x8] sm:$0x3]
    %v94 = vld [vmem:[#allocation2 + $0xa] sm:$0x3]
    %v95 = vld [vmem:[#allocation2 + $0xc] sm:$0x3]
    %v96 = vld [vmem:[#allocation2 + $0xe] sm:$0x3]
    %v97 = vlaneseq
    %v98 = vshrl.u32 %v97, 7
    %v99 = vsub.s32 0, %v98
    %v100 = vrot.slane %v63, %v99
    %v101 = vlaneseq
    %v102 = vshrl.u32 %v101, 7
    %v103 = vsub.s32 0, %v102
    %v104 = vrot.slane %v77, %v103
    %v105 = vlaneseq
    %v106 = vshrl.u32 %v105, 7
    %v107 = vsub.s32 0, %v106
    %v108 = vrot.slane %v85, %v107
    %v109 = vlaneseq
    %v110 = vshrl.u32 %v109, 7
    %v111 = vsub.s32 0, %v110
    %v112 = vrot.slane %v87, %v111
    %v113 = vlaneseq
    %v114 = vshrl.u32 %v113, 7
    %v115 = vsub.s32 0, %v114
    %v116 = vrot.slane %v70, %v115
    %v117 = vlaneseq
    %v118 = vshrl.u32 %v117, 7
    %v119 = vsub.s32 0, %v118
    %v120 = vrot.slane %v84, %v119
    %v121 = vlaneseq
    %v122 = vshrl.u32 %v121, 7
    %v123 = vsub.s32 0, %v122
    %v124 = vrot.slane %v86, %v123
    %v125 = vlaneseq
    %v126 = vshrl.u32 %v125, 7
    %v127 = vsub.s32 0, %v126
    %v128 = vrot.slane %v88, %v127
    %v137 = vadd.f32 %v89, %v100
    %v138 = vadd.f32 %v90, %v104
    %v139 = vadd.f32 %v91, %v108
    %v140 = vadd.f32 %v92, %v112
    %v141 = vadd.f32 %v93, %v116
    %v142 = vadd.f32 %v94, %v120
    %v143 = vadd.f32 %v95, %v124
    %v144 = vadd.f32 %v96, %v128
    %vm145 = vcmask 254976
    %146 = vst.msk [vmem:[#allocation7] sm:$0x3] %vm145, %v137
    %147 = vst.msk [vmem:[#allocation7 + $0x2] sm:$0x3] %vm145, %v138
    %148 = vst.msk [vmem:[#allocation7 + $0x4] sm:$0x3] %vm145, %v139
    %149 = vst.msk [vmem:[#allocation7 + $0x6] sm:$0x3] %vm145, %v140
    %150 = vst.msk [vmem:[#allocation7 + $0x8] sm:$0x3] %vm145, %v141
    %151 = vst.msk [vmem:[#allocation7 + $0xa] sm:$0x3] %vm145, %v142
    %152 = vst.msk [vmem:[#allocation7 + $0xc] sm:$0x3] %vm145, %v143
    %153 = vst.msk [vmem:[#allocation7 + $0xe] sm:$0x3] %vm145, %v144
    // Predicated region
    $region18: #{tpu_custom_call.1} parent=1 // pred_check
      _
    $region19: #{tpu_custom_call.1} parent=1 // pred_check_branch
      %155 = sbr.rel (0) target = $region21
    $region20: #{tpu_custom_call.1} parent=1 // pred_region
      %s157 = ssub.s32 256, 256
      %158 = vsyncadd [#allocation4], %s157
      %s159 = sshll.u32 [#allocation7], 4
      %s160 = int_to_ptr.vmem [resolvable:$true] %s159
      %165 = dma.vmem_to_hbm [thread:$0]  %s160, 256, %s2, [#allocation4], 32, 32, 2
    $region21: #{tpu_custom_call.1} parent=1 // pred_fallthru
      _
    // Predicated region
    $region22: #{tpu_custom_call.1} parent=1 // pred_check
      _
    $region23: #{tpu_custom_call.1} parent=1 // pred_check_branch
      %167 = sbr.rel (0) target = $region25
    $region24: #{tpu_custom_call.1} parent=1 // pred_region
      %168 = dma.done [#allocation4], 256
    $region25: #{tpu_custom_call.1} parent=1 // pred_fallthru
      _
    %169 = vsyncpa [#allocation3], 1
    %170 = vsyncpa [#allocation6], 1
    %171 = vsyncpa [#allocation4], 1

</llo_original>
